<compile_context>
chip_gen: v5e
topology: v5e:2x2
jax: 0.10.0
libtpu: 0.0.40
codegen_flags: <defaults>
</compile_context>

<pallas_src>
import jax
import jax.numpy as jnp
from jax import lax
from jax.experimental import pallas as pl
from jax.experimental.pallas import tpu as pltpu


def _round_up(x, m):
    return (x + m - 1) // m * m


def _pick_tile_b(B, hidden_dim, in_dtype, max_tile_b):
    """128-aligned batch tile, adapted to B / hidden_dim / input dtype."""
    itemsize = jnp.dtype(in_dtype).itemsize
    # Keep the double-buffered x window under ~8 MiB (comfortable inside v5e's
    # 16 MiB scoped-VMEM default, and far under v7x's 64 MiB physical VMEM).
    vmem_cap = (8 * 1024 * 1024) // (2 * hidden_dim * itemsize) // 128 * 128
    cap = max(128, min(max_tile_b, vmem_cap))
    if B <= 128:
        # Small batches: one step; round to 128 (not 8) so output stores stay
        # unmasked and bf16 sublane packing of x is clean. Pad waste is tiny.
        return 128
    # Large batches: >= 2 grid steps (v7x dual-TC sharding via "parallel"),
    # tile as big as the cap allows (v5e/v6e step-overhead amortization).
    return min(cap, _round_up(pl.cdiv(B, 2), 128))


def _mlp_kernel(x_ref, w2_ref, b2_ref, w3_ref, b3_ref, w4t_ref, b4_ref, o_ref):
    # One batch tile per grid step. Matmuls in bf16 on the MXU with f32
    # accumulation; elementwise math (bias / ReLU / sigmoid) stays in f32.
    x = x_ref[...]
    if x.dtype != jnp.bfloat16:          # bf16 producers skip this VALU cast
        x = x.astype(jnp.bfloat16)

    # linear2 + relu2
    h = jnp.dot(x, w2_ref[...], preferred_element_type=jnp.float32) + b2_ref[...]
    h = jnp.maximum(h, 0.0)

    # linear3 + relu3
    h = jnp.dot(h.astype(jnp.bfloat16), w3_ref[...],
                preferred_element_type=jnp.float32) + b3_ref[...]
    h = jnp.maximum(h, 0.0)

    # linear4, computed transposed so the stored slab is lane-dense:
    #   z_t (out_rows, tile_b) = W4t (out_rows, 64) . h^T (64, tile_b)
    z_t = lax.dot_general(w4t_ref[...], h.astype(jnp.bfloat16),
                          dimension_numbers=(((1,), (1,)), ((), ())),
                          preferred_element_type=jnp.float32)
    z_t = z_t + b4_ref[...]

    # sigmoid: exp -> EUP, approx reciprocal -> EUP (keeps VALU slots free)
    y = pl.reciprocal(1.0 + jnp.exp(-z_t), approx=True)
    o_ref[...] = y.astype(o_ref.dtype)


def discriminator2_forward(f, params, *, max_tile_b=2048):
    """Forward pass of Discriminator2.

    f: (B, hidden_dim). Prefer bf16 from the producer (halves the dominant HBM
       stream); f32 is accepted and cast in-kernel.
    params: (w2 (hidden,128), b2 (1,128), w3 (128,64), b3 (1,64),
             w4t (output_dim,64), b4 (output_dim,1)) -- final layer stored
             transposed (PyTorch's native (out, in) layout).
    Returns (B, output_dim) float32.
    """
    w2, b2, w3, b3, w4t, b4 = params
    B, hidden_dim = f.shape
    output_dim = w4t.shape[0]

    tile_b = _pick_tile_b(B, hidden_dim, f.dtype, max_tile_b)
    grid = (pl.cdiv(B, tile_b),)   # last block may be partial: OOB reads are
                                   # garbage (row-independent), OOB writes masked.

    # Pad the final layer to 8 output rows so the (out_rows, tile_b) output block
    # is made of full (8,128) vreg tiles -> unmasked, lane-dense stores. Padded
    # rows evaluate to sigmoid(0)=0.5 and are sliced off below.
    out_rows = _round_up(output_dim, 8)
    if out_rows != output_dim:
        w4t = jnp.pad(w4t, ((0, out_rows - output_dim), (0, 0)))
        b4 = jnp.pad(b4, ((0, out_rows - output_dim), (0, 0)))

    # Weights go through the MXU in bf16 (tiny, cast once here); biases stay f32.
    w2 = w2.astype(jnp.bfloat16)
    w3 = w3.astype(jnp.bfloat16)
    w4t = w4t.astype(jnp.bfloat16)
    b2 = b2.astype(jnp.float32)
    b3 = b3.astype(jnp.float32)
    b4 = b4.astype(jnp.float32)

    def full(arr):
        nd = arr.ndim
        return pl.BlockSpec(arr.shape, lambda i, _nd=nd: (0,) * _nd)

    out_t = pl.pallas_call(
        _mlp_kernel,
        out_shape=jax.ShapeDtypeStruct((out_rows, B), jnp.float32),
        grid=grid,
        in_specs=[
            pl.BlockSpec((tile_b, hidden_dim), lambda i: (i, 0)),  # x batch tile
            full(w2), full(b2),
            full(w3), full(b3),
            full(w4t), full(b4),
        ],
        out_specs=pl.BlockSpec((out_rows, tile_b), lambda i: (0, i)),
        compiler_params=pltpu.CompilerParams(
            dimension_semantics=("parallel",)),
    )(f, w2, b2, w3, b3, w4t, b4)

    # (out_rows, B) -> (B, output_dim); tiny transpose in the wrapper.
    return out_t[:output_dim, :].T


def init_params(key, hidden_dim, output_dim):
    """Deterministic init mimicking nn.Linear's uniform(-1/sqrt(fan_in), 1/sqrt(fan_in))."""
    def linear(key, fan_in, fan_out):
        kw, kb = jax.random.split(key)
        bound = 1.0 / jnp.sqrt(float(fan_in))
        w = jax.random.uniform(kw, (fan_in, fan_out), jnp.float32, -bound, bound)
        b = jax.random.uniform(kb, (1, fan_out), jnp.float32, -bound, bound)
        return w, b

    k2, k3, k4 = jax.random.split(key, 3)
    w2, b2 = linear(k2, hidden_dim, 128)
    w3, b3 = linear(k3, 128, 64)
    w4, b4 = linear(k4, 64, output_dim)
    # Final layer stored transposed: weights (output_dim, 64), bias (output_dim, 1).
    return (w2, b2, w3, b3, w4.T, b4.T)


def _reference(f_f32, params):
    w2, b2, w3, b3, w4t, b4 = params
    h = jnp.maximum(f_f32 @ w2 + b2, 0.0)
    h = jnp.maximum(h @ w3 + b3, 0.0)
    return jax.nn.sigmoid(h @ w4t.T + b4.T)


if __name__ == "__main__":
    hidden_dim = 32
    output_dim = 4

    key = jax.random.PRNGKey(0)
    kx, kp = jax.random.split(key)
    params = init_params(kp, hidden_dim, output_dim)

    # batch=16 bf16: aligned small batch (single 128-row step, partial block);
    # batch=10 bf16: ragged small batch (OOB-masked stores, no wrapper pad);
    # batch=1500 bf16: 2-step grid (tile_b=768), partial last block;
    # batch=16 f32: exercises the in-kernel f32->bf16 cast fallback path.
    cases = ((16, jnp.bfloat16), (10, jnp.bfloat16), (1500, jnp.bfloat16),
             (16, jnp.float32))
    for batch, dtype in cases:
        f_f32 = jax.random.normal(jax.random.fold_in(kx, batch),
                                  (batch, hidden_dim), jnp.float32)
        f = f_f32.astype(dtype)
        out = jax.block_until_ready(discriminator2_forward(f, params))
        ref = _reference(f.astype(jnp.float32), params)
        assert out.shape == (batch, output_dim)
        # bf16 matmuls (f32 accumulation) + approx reciprocal -> loose-ish tolerance.
        assert jnp.allclose(out, ref, atol=3e-2, rtol=0.0), \
            f"mismatch at batch={batch} dtype={dtype}"

    print("KERNEL_OK")
</pallas_src>

<mosaic_0001>
module attributes {stable_mosaic.version = 11 : i64} {
  func.func @_mlp_kernel(%arg0: i32, %arg1: memref<128x32xbf16, #tpu.memory_space<vmem>>, %arg2: memref<32x128xbf16, #tpu.memory_space<vmem>>, %arg3: memref<1x128xf32, #tpu.memory_space<vmem>>, %arg4: memref<128x64xbf16, #tpu.memory_space<vmem>>, %arg5: memref<1x64xf32, #tpu.memory_space<vmem>>, %arg6: memref<8x64xbf16, #tpu.memory_space<vmem>>, %arg7: memref<8x1xf32, #tpu.memory_space<vmem>>, %arg8: memref<8x128xf32, #tpu.memory_space<vmem>>) attributes {dimension_semantics = [#tpu.dimension_semantics<parallel>], iteration_bounds = array<i64: 1>, scalar_prefetch = 0 : i64, scratch_operands = 0 : i64, tpu.core_type = #tpu.core_type<tc>, window_params = [{transform_indices = @transform_0, window_bounds = array<i64: 128, 32>}, {pipeline_mode = #tpu.pipeline_mode<synchronous>, transform_indices = @transform_1, window_bounds = array<i64: 32, 128>}, {pipeline_mode = #tpu.pipeline_mode<synchronous>, transform_indices = @transform_2, window_bounds = array<i64: 1, 128>}, {pipeline_mode = #tpu.pipeline_mode<synchronous>, transform_indices = @transform_3, window_bounds = array<i64: 128, 64>}, {pipeline_mode = #tpu.pipeline_mode<synchronous>, transform_indices = @transform_4, window_bounds = array<i64: 1, 64>}, {pipeline_mode = #tpu.pipeline_mode<synchronous>, transform_indices = @transform_5, window_bounds = array<i64: 8, 64>}, {pipeline_mode = #tpu.pipeline_mode<synchronous>, transform_indices = @transform_6, window_bounds = array<i64: 8, 1>}, {transform_indices = @transform_7, window_bounds = array<i64: 8, 128>}]} {
    %c0 = arith.constant 0 : index
    %c0_0 = arith.constant 0 : index
    %0 = vector.load %arg1[%c0, %c0_0] : memref<128x32xbf16, #tpu.memory_space<vmem>>, vector<128x32xbf16>
    %c0_1 = arith.constant 0 : index
    %c0_2 = arith.constant 0 : index
    %1 = vector.load %arg2[%c0_1, %c0_2] : memref<32x128xbf16, #tpu.memory_space<vmem>>, vector<32x128xbf16>
    %cst = arith.constant dense<0.000000e+00> : vector<128x128xf32>
    %2 = tpu.matmul %0, %1, %cst {dimension_numbers = #tpu.dot_dimension_numbers<[1], [0], [0], [1], [0, 0, 1, 1], [], []>} : vector<128x32xbf16>, vector<32x128xbf16>, vector<128x128xf32> -> vector<128x128xf32>
    %c0_3 = arith.constant 0 : index
    %c0_4 = arith.constant 0 : index
    %3 = vector.load %arg3[%c0_3, %c0_4] : memref<1x128xf32, #tpu.memory_space<vmem>>, vector<1x128xf32>
    %4 = vector.broadcast %3 : vector<1x128xf32> to vector<128x128xf32>
    %5 = arith.addf %2, %4 : vector<128x128xf32>
    %cst_5 = arith.constant 0.000000e+00 : f32
    %6 = vector.broadcast %cst_5 : f32 to vector<128x128xf32>
    %7 = arith.maximumf %5, %6 : vector<128x128xf32>
    %8 = arith.truncf %7 : vector<128x128xf32> to vector<128x128xbf16>
    %c0_6 = arith.constant 0 : index
    %c0_7 = arith.constant 0 : index
    %9 = vector.load %arg4[%c0_6, %c0_7] : memref<128x64xbf16, #tpu.memory_space<vmem>>, vector<128x64xbf16>
    %cst_8 = arith.constant dense<0.000000e+00> : vector<128x64xf32>
    %10 = tpu.matmul %8, %9, %cst_8 {dimension_numbers = #tpu.dot_dimension_numbers<[1], [0], [0], [1], [0, 0, 1, 1], [], []>} : vector<128x128xbf16>, vector<128x64xbf16>, vector<128x64xf32> -> vector<128x64xf32>
    %c0_9 = arith.constant 0 : index
    %c0_10 = arith.constant 0 : index
    %11 = vector.load %arg5[%c0_9, %c0_10] : memref<1x64xf32, #tpu.memory_space<vmem>>, vector<1x64xf32>
    %12 = vector.broadcast %11 : vector<1x64xf32> to vector<128x64xf32>
    %13 = arith.addf %10, %12 : vector<128x64xf32>
    %cst_11 = arith.constant 0.000000e+00 : f32
    %14 = vector.broadcast %cst_11 : f32 to vector<128x64xf32>
    %15 = arith.maximumf %13, %14 : vector<128x64xf32>
    %c0_12 = arith.constant 0 : index
    %c0_13 = arith.constant 0 : index
    %16 = vector.load %arg6[%c0_12, %c0_13] : memref<8x64xbf16, #tpu.memory_space<vmem>>, vector<8x64xbf16>
    %17 = arith.truncf %15 : vector<128x64xf32> to vector<128x64xbf16>
    %cst_14 = arith.constant dense<0.000000e+00> : vector<8x128xf32>
    %18 = tpu.matmul %16, %17, %cst_14 {dimension_numbers = #tpu.dot_dimension_numbers<[1], [1], [0], [0], [0, 0, 1, 0], [], []>} : vector<8x64xbf16>, vector<128x64xbf16>, vector<8x128xf32> -> vector<8x128xf32>
    %c0_15 = arith.constant 0 : index
    %c0_16 = arith.constant 0 : index
    %19 = vector.load %arg7[%c0_15, %c0_16] : memref<8x1xf32, #tpu.memory_space<vmem>>, vector<8x1xf32>
    %20 = vector.broadcast %19 : vector<8x1xf32> to vector<8x128xf32>
    %21 = arith.addf %18, %20 : vector<8x128xf32>
    %cst_17 = arith.constant 0.000000e+00 : f32
    %22 = vector.broadcast %cst_17 : f32 to vector<8x128xf32>
    %23 = arith.subf %22, %21 : vector<8x128xf32>
    %24 = math.exp %23 : vector<8x128xf32>
    %cst_18 = arith.constant 1.000000e+00 : f32
    %25 = vector.broadcast %cst_18 : f32 to vector<8x128xf32>
    %26 = arith.addf %25, %24 : vector<8x128xf32>
    %27 = tpu.reciprocal %26 {approx = true} : vector<8x128xf32> -> vector<8x128xf32>
    %c0_19 = arith.constant 0 : index
    %c0_20 = arith.constant 0 : index
    %28 = vector.load %arg8[%c0_19, %c0_20] : memref<8x128xf32, #tpu.memory_space<vmem>>, vector<8x128xf32>
    tpu.vector_store %arg8[%c0_19, %c0_20], %27 {strides = array<i32>} : memref<8x128xf32, #tpu.memory_space<vmem>>, vector<8x128xf32>,
    return
  }
  func.func @transform_0(%arg0: i32) -> (i32, i32) {
    %c0_i32 = arith.constant 0 : i32
    %c0_i32_0 = arith.constant 0 : i32
    return %arg0, %c0_i32 : i32, i32
  }
  func.func @transform_1(%arg0: i32) -> (i32, i32) {
    %c0_i32 = arith.constant 0 : i32
    %c0_i32_0 = arith.constant 0 : i32
    %c0_i32_1 = arith.constant 0 : i32
    return %c0_i32, %c0_i32_0 : i32, i32
  }
  func.func @transform_2(%arg0: i32) -> (i32, i32) {
    %c0_i32 = arith.constant 0 : i32
    %c0_i32_0 = arith.constant 0 : i32
    %c0_i32_1 = arith.constant 0 : i32
    return %c0_i32, %c0_i32_0 : i32, i32
  }
  func.func @transform_3(%arg0: i32) -> (i32, i32) {
    %c0_i32 = arith.constant 0 : i32
    %c0_i32_0 = arith.constant 0 : i32
    %c0_i32_1 = arith.constant 0 : i32
    return %c0_i32, %c0_i32_0 : i32, i32
  }
  func.func @transform_4(%arg0: i32) -> (i32, i32) {
    %c0_i32 = arith.constant 0 : i32
    %c0_i32_0 = arith.constant 0 : i32
    %c0_i32_1 = arith.constant 0 : i32
    return %c0_i32, %c0_i32_0 : i32, i32
  }
  func.func @transform_5(%arg0: i32) -> (i32, i32) {
    %c0_i32 = arith.constant 0 : i32
    %c0_i32_0 = arith.constant 0 : i32
    %c0_i32_1 = arith.constant 0 : i32
    return %c0_i32, %c0_i32_0 : i32, i32
  }
  func.func @transform_6(%arg0: i32) -> (i32, i32) {
    %c0_i32 = arith.constant 0 : i32
    %c0_i32_0 = arith.constant 0 : i32
    %c0_i32_1 = arith.constant 0 : i32
    return %c0_i32, %c0_i32_0 : i32, i32
  }
  func.func @transform_7(%arg0: i32) -> (i32, i32) {
    %c0_i32 = arith.constant 0 : i32
    %c0_i32_0 = arith.constant 0 : i32
    return %c0_i32, %arg0 : i32, i32
  }
}

</mosaic_0001>

<llo_original>
// kernel: tpu_custom_call.1
$region0: #{tpu_custom_call.1}
  #allocation0 [shape = 'u32[]', space=smem, size = 0x4, offset = 0x4, fixed_abs, tag = 'smem constant byte address 0x4 - core index']
  #allocation1 [shape = 'u32[72,128]{1,0:T(1,128)}', space=vmem, size = 0x9000, scoped, tag = 'internal scratch']
  %s0 = inlined_call_operand.vmem [shape: bf16[16,32], index: 0, kind: input, shape index: {}]
  %s1 = inlined_call_operand.vmem [shape: bf16[32,128], index: 1, kind: input, shape index: {}]
  %s2 = inlined_call_operand.vmem [shape: f32[1,128], index: 2, kind: input, shape index: {}]
  %s3 = inlined_call_operand.vmem [shape: bf16[128,64], index: 3, kind: input, shape index: {}]
  %s4 = inlined_call_operand.vmem [shape: f32[1,64], index: 4, kind: input, shape index: {}]
  %s5 = inlined_call_operand.vmem [shape: bf16[8,64], index: 5, kind: input, shape index: {}]
  %s6 = inlined_call_operand.vmem [shape: f32[8,1], index: 6, kind: input, shape index: {}]
  %s7 = inlined_call_operand.hbm [shape: f32[8,16], index: 7, kind: output, shape index: {}]
  %s8 = sld [smem:[#allocation0]]
  $region38: #{tpu_custom_call.1} parent=0
    _
  %s10 = ssub.s32 1, %s8
  %s11 = scalar_select 0, %s10, %s8
  $region1: #{tpu_custom_call.1} parent=0
    #allocation2 [shape = 'u8[4096]{0}', space=vmem, size = 0x1000, scoped, tag = 'output window, operand 0, single buffered']
    #allocation3 [shape = 's32[1]{0}', space=sflag, size = 0x4, scoped, tag = 'scoped memory for tpu_custom_call.1']
    %12 = vsyncpa [#allocation3], 0
    // Predicated region
    $region2: #{tpu_custom_call.1} parent=1 // pred_check
      _
    $region3: #{tpu_custom_call.1} parent=1 // pred_check_branch
      %14 = sbr.rel (0) target = $region5
    $region4: #{tpu_custom_call.1} parent=1 // pred_region
      _
    $region5: #{tpu_custom_call.1} parent=1 // pred_fallthru
      _
    // Predicated region
    $region6: #{tpu_custom_call.1} parent=1 // pred_check
      _
    $region7: #{tpu_custom_call.1} parent=1 // pred_check_branch
      %16 = sbr.rel (0) target = $region9
    $region8: #{tpu_custom_call.1} parent=1 // pred_region
      _
    $region9: #{tpu_custom_call.1} parent=1 // pred_fallthru
      _
    // Predicated region
    $region10: #{tpu_custom_call.1} parent=1 // pred_check
      _
    $region11: #{tpu_custom_call.1} parent=1 // pred_check_branch
      %18 = sbr.rel (0) target = $region13
    $region12: #{tpu_custom_call.1} parent=1 // pred_region
      _
    $region13: #{tpu_custom_call.1} parent=1 // pred_fallthru
      _
    // Predicated region
    $region14: #{tpu_custom_call.1} parent=1 // pred_check
      _
    $region15: #{tpu_custom_call.1} parent=1 // pred_check_branch
      %20 = sbr.rel (0) target = $region17
    $region16: #{tpu_custom_call.1} parent=1 // pred_region
      _
    $region17: #{tpu_custom_call.1} parent=1 // pred_fallthru
      _
    // Predicated region
    $region18: #{tpu_custom_call.1} parent=1 // pred_check
      _
    $region19: #{tpu_custom_call.1} parent=1 // pred_check_branch
      %22 = sbr.rel (0) target = $region21
    $region20: #{tpu_custom_call.1} parent=1 // pred_region
      _
    $region21: #{tpu_custom_call.1} parent=1 // pred_fallthru
      _
    // Predicated region
    $region22: #{tpu_custom_call.1} parent=1 // pred_check
      _
    $region23: #{tpu_custom_call.1} parent=1 // pred_check_branch
      %24 = sbr.rel (0) target = $region25
    $region24: #{tpu_custom_call.1} parent=1 // pred_region
      _
    $region25: #{tpu_custom_call.1} parent=1 // pred_fallthru
      _
    // Predicated region
    $region26: #{tpu_custom_call.1} parent=1 // pred_check
      _
    $region27: #{tpu_custom_call.1} parent=1 // pred_check_branch
      %26 = sbr.rel (0) target = $region29
    $region28: #{tpu_custom_call.1} parent=1 // pred_region
      _
    $region29: #{tpu_custom_call.1} parent=1 // pred_fallthru
      _
    %v28 = vld [vmem:[%s0] sm:$0xf]
    %v29 = vld [vmem:[%s0 + $0x4] sm:$0xf]
    %v30 = vld [vmem:[%s0 + $0x8] sm:$0xf]
    %v31 = vld [vmem:[%s0 + $0xc] sm:$0xf]
    %v32 = vld [vmem:[%s0 + $0x10] sm:$0xf]
    %v33 = vld [vmem:[%s0 + $0x14] sm:$0xf]
    %v34 = vld [vmem:[%s0 + $0x18] sm:$0xf]
    %v35 = vld [vmem:[%s0 + $0x1c] sm:$0xf]
    %v36 = vld [vmem:[%s0 + $0x20] sm:$0xf]
    %v37 = vld [vmem:[%s0 + $0x24] sm:$0xf]
    %v38 = vld [vmem:[%s0 + $0x28] sm:$0xf]
    %v39 = vld [vmem:[%s0 + $0x2c] sm:$0xf]
    %v40 = vld [vmem:[%s0 + $0x30] sm:$0xf]
    %v41 = vld [vmem:[%s0 + $0x34] sm:$0xf]
    %v42 = vld [vmem:[%s0 + $0x38] sm:$0xf]
    %v43 = vld [vmem:[%s0 + $0x3c] sm:$0xf]
    %v44 = vld [vmem:[%s1] sm:$0xf]
    %v45 = vld [vmem:[%s1 + $0x4] sm:$0xf]
    %v46 = vld [vmem:[%s1 + $0x8] sm:$0xf]
    %v47 = vld [vmem:[%s1 + $0xc] sm:$0xf]
    %v48 = vld [vmem:[%s2] sm:$0x1]
    %v50 = vperm.slane %v48, 0
    %v68 = vunpack.c.l.b16 %v28
    %v69 = vunpack.c.l.b16 %v29
    %v70 = vunpack.c.l.b16 %v30
    %v71 = vunpack.c.l.b16 %v31
    %v72 = vunpack.c.l.b16 %v32
    %v73 = vunpack.c.l.b16 %v33
    %v74 = vunpack.c.l.b16 %v34
    %v75 = vunpack.c.l.b16 %v35
    %v76 = vunpack.c.l.b16 %v36
    %v77 = vunpack.c.l.b16 %v37
    %v78 = vunpack.c.l.b16 %v38
    %v79 = vunpack.c.l.b16 %v39
    %v80 = vunpack.c.l.b16 %v40
    %v81 = vunpack.c.l.b16 %v41
    %v82 = vunpack.c.l.b16 %v42
    %v83 = vunpack.c.l.b16 %v43
    %v84 = vpack.c.b16 %v69, %v68
    %v85 = vpack.c.b16 %v71, %v70
    %v86 = vpack.c.b16 %v73, %v72
    %v87 = vpack.c.b16 %v75, %v74
    %v88 = vpack.c.b16 %v77, %v76
    %v89 = vpack.c.b16 %v79, %v78
    %v90 = vpack.c.b16 %v81, %v80
    %v91 = vpack.c.b16 %v83, %v82
    %v96 = vunpack.c.l.b16 %v44
    %v97 = vunpack.c.l.b16 %v45
    %v98 = vunpack.c.l.b16 %v46
    %v99 = vunpack.c.l.b16 %v47
    %v100 = vpack.c.b16 %v97, %v96
    %v101 = vpack.c.b16 %v99, %v98
    %vm104 = vcmask 261120
    %v106 = vsel %vm104, %v84, 0
    %v109 = vsel %vm104, %v85, 0
    %v112 = vsel %vm104, %v86, 0
    %v115 = vsel %vm104, %v87, 0
    %v118 = vsel %vm104, %v88, 0
    %v121 = vsel %vm104, %v89, 0
    %v124 = vsel %vm104, %v90, 0
    %v127 = vsel %vm104, %v91, 0
    %129 = vmatpush.bf16.msra.mxu0 0
    %130 = vmatpush.bf16.msra.mxu0 0
    %131 = vmatpush.bf16.msra.mxu0 0
    %132 = vmatpush.bf16.msra.mxu0 0
    %133 = vmatpush.bf16.msra.mxu0 0
    %134 = vmatpush.bf16.msra.mxu0 0
    %135 = vmatpush.bf16.msra.mxu0 %v101
    %136 = vmatpush.bf16.msra.mxu0 %v100
    %137 = vmatmul.bf16.gmra.mxu0 %v106
    %v138 = vpop.f32.mrf.mxu0
    %v139 = vadd.f32 %v50, %v138
    %v140 = vpop.f32.mrf.mxu0
    %v141 = vadd.f32 %v50, %v140
    %142 = vmatmul.bf16.gmra.mxu0 %v109
    %v143 = vpop.f32.mrf.mxu0
    %v144 = vadd.f32 %v50, %v143
    %v145 = vpop.f32.mrf.mxu0
    %v146 = vadd.f32 %v50, %v145
    %147 = vmatmul.bf16.gmra.mxu0 %v112
    %v148 = vpop.f32.mrf.mxu0
    %v149 = vadd.f32 %v50, %v148
    %v150 = vpop.f32.mrf.mxu0
    %v151 = vadd.f32 %v50, %v150
    %152 = vmatmul.bf16.gmra.mxu0 %v115
    %v153 = vpop.f32.mrf.mxu0
    %v154 = vadd.f32 %v50, %v153
    %v155 = vpop.f32.mrf.mxu0
    %v156 = vadd.f32 %v50, %v155
    %157 = vmatmul.bf16.gmra.mxu0 %v118
    %v158 = vpop.f32.mrf.mxu0
    %v159 = vadd.f32 %v50, %v158
    %v160 = vpop.f32.mrf.mxu0
    %v161 = vadd.f32 %v50, %v160
    %162 = vmatmul.bf16.gmra.mxu0 %v121
    %v163 = vpop.f32.mrf.mxu0
    %v164 = vadd.f32 %v50, %v163
    %v165 = vpop.f32.mrf.mxu0
    %v166 = vadd.f32 %v50, %v165
    %167 = vmatmul.bf16.gmra.mxu0 %v124
    %v168 = vpop.f32.mrf.mxu0
    %v169 = vadd.f32 %v50, %v168
    %v170 = vpop.f32.mrf.mxu0
    %v171 = vadd.f32 %v50, %v170
    %172 = vmatmul.bf16.gmra.mxu0 %v127
    %v173 = vpop.f32.mrf.mxu0
    %v174 = vadd.f32 %v50, %v173
    %v175 = vpop.f32.mrf.mxu0
    %v176 = vadd.f32 %v50, %v175
    %177 = vdwg.mxu0
    %v178 = vmax.f32 %v139, 0.0
    %v179 = vmax.f32 %v141, 0.0
    %v180 = vmax.f32 %v144, 0.0
    %v181 = vmax.f32 %v146, 0.0
    %v182 = vmax.f32 %v149, 0.0
    %v183 = vmax.f32 %v151, 0.0
    %v184 = vmax.f32 %v154, 0.0
    %v185 = vmax.f32 %v156, 0.0
    %v186 = vmax.f32 %v159, 0.0
    %v187 = vmax.f32 %v161, 0.0
    %v188 = vmax.f32 %v164, 0.0
    %v189 = vmax.f32 %v166, 0.0
    %v190 = vmax.f32 %v169, 0.0
    %v191 = vmax.f32 %v171, 0.0
    %v192 = vmax.f32 %v174, 0.0
    %v193 = vmax.f32 %v176, 0.0
    %v194 = vpack.c.bf16 %v179, %v178
    %v195 = vpack.c.bf16 %v181, %v180
    %v196 = vpack.c.bf16 %v183, %v182
    %v197 = vpack.c.bf16 %v185, %v184
    %v198 = vpack.c.bf16 %v187, %v186
    %v199 = vpack.c.bf16 %v189, %v188
    %v200 = vpack.c.bf16 %v191, %v190
    %v201 = vpack.c.bf16 %v193, %v192
    %v202 = vld [vmem:[%s3] sm:$0xf]
    %v203 = vld [vmem:[%s3 + $0x4] sm:$0xf]
    %v204 = vld [vmem:[%s3 + $0x8] sm:$0xf]
    %v205 = vld [vmem:[%s3 + $0xc] sm:$0xf]
    %v206 = vld [vmem:[%s3 + $0x10] sm:$0xf]
    %v207 = vld [vmem:[%s3 + $0x14] sm:$0xf]
    %v208 = vld [vmem:[%s3 + $0x18] sm:$0xf]
    %v209 = vld [vmem:[%s3 + $0x1c] sm:$0xf]
    %v210 = vld [vmem:[%s3 + $0x20] sm:$0xf]
    %v211 = vld [vmem:[%s3 + $0x24] sm:$0xf]
    %v212 = vld [vmem:[%s3 + $0x28] sm:$0xf]
    %v213 = vld [vmem:[%s3 + $0x2c] sm:$0xf]
    %v214 = vld [vmem:[%s3 + $0x30] sm:$0xf]
    %v215 = vld [vmem:[%s3 + $0x34] sm:$0xf]
    %v216 = vld [vmem:[%s3 + $0x38] sm:$0xf]
    %v217 = vld [vmem:[%s3 + $0x3c] sm:$0xf]
    %v218 = vld [vmem:[%s4] sm:$0x1]
    %v220 = vperm.slane %v218, 0
    %v238 = vunpack.c.l.b16 %v202
    %v239 = vunpack.c.l.b16 %v203
    %v240 = vunpack.c.l.b16 %v204
    %v241 = vunpack.c.l.b16 %v205
    %v242 = vunpack.c.l.b16 %v206
    %v243 = vunpack.c.l.b16 %v207
    %v244 = vunpack.c.l.b16 %v208
    %v245 = vunpack.c.l.b16 %v209
    %v246 = vunpack.c.l.b16 %v210
    %v247 = vunpack.c.l.b16 %v211
    %v248 = vunpack.c.l.b16 %v212
    %v249 = vunpack.c.l.b16 %v213
    %v250 = vunpack.c.l.b16 %v214
    %v251 = vunpack.c.l.b16 %v215
    %v252 = vunpack.c.l.b16 %v216
    %v253 = vunpack.c.l.b16 %v217
    %v254 = vpack.c.b16 %v239, %v238
    %v255 = vpack.c.b16 %v241, %v240
    %v256 = vpack.c.b16 %v243, %v242
    %v257 = vpack.c.b16 %v245, %v244
    %v258 = vpack.c.b16 %v247, %v246
    %v259 = vpack.c.b16 %v249, %v248
    %v260 = vpack.c.b16 %v251, %v250
    %v261 = vpack.c.b16 %v253, %v252
    %270 = vmatpush.bf16.msra.mxu0 %v261
    %271 = vmatpush.bf16.msra.mxu0 %v260
    %272 = vmatpush.bf16.msra.mxu0 %v259
    %273 = vmatpush.bf16.msra.mxu0 %v258
    %274 = vmatpush.bf16.msra.mxu0 %v257
    %275 = vmatpush.bf16.msra.mxu0 %v256
    %276 = vmatpush.bf16.msra.mxu0 %v255
    %277 = vmatpush.bf16.msra.mxu0 %v254
    %278 = vmatmul.bf16.gmra.mxu0 %v194
    %v279 = vpop.f32.mrf.mxu0
    %v280 = vadd.f32 %v220, %v279
    %v281 = vpop.f32.mrf.mxu0
    %v282 = vadd.f32 %v220, %v281
    %283 = vmatmul.bf16.gmra.mxu0 %v195
    %v284 = vpop.f32.mrf.mxu0
    %v285 = vadd.f32 %v220, %v284
    %v286 = vpop.f32.mrf.mxu0
    %v287 = vadd.f32 %v220, %v286
    %288 = vmatmul.bf16.gmra.mxu0 %v196
    %v289 = vpop.f32.mrf.mxu0
    %v290 = vadd.f32 %v220, %v289
    %v291 = vpop.f32.mrf.mxu0
    %v292 = vadd.f32 %v220, %v291
    %293 = vmatmul.bf16.gmra.mxu0 %v197
    %v294 = vpop.f32.mrf.mxu0
    %v295 = vadd.f32 %v220, %v294
    %v296 = vpop.f32.mrf.mxu0
    %v297 = vadd.f32 %v220, %v296
    %298 = vmatmul.bf16.gmra.mxu0 %v198
    %v299 = vpop.f32.mrf.mxu0
    %v300 = vadd.f32 %v220, %v299
    %v301 = vpop.f32.mrf.mxu0
    %v302 = vadd.f32 %v220, %v301
    %303 = vmatmul.bf16.gmra.mxu0 %v199
    %v304 = vpop.f32.mrf.mxu0
    %v305 = vadd.f32 %v220, %v304
    %v306 = vpop.f32.mrf.mxu0
    %v307 = vadd.f32 %v220, %v306
    %308 = vmatmul.bf16.gmra.mxu0 %v200
    %v309 = vpop.f32.mrf.mxu0
    %v310 = vadd.f32 %v220, %v309
    %v311 = vpop.f32.mrf.mxu0
    %v312 = vadd.f32 %v220, %v311
    %313 = vmatmul.bf16.gmra.mxu0 %v201
    %v314 = vpop.f32.mrf.mxu0
    %v315 = vadd.f32 %v220, %v314
    %v316 = vpop.f32.mrf.mxu0
    %v317 = vadd.f32 %v220, %v316
    %318 = vdwg.mxu0
    %v319 = vmax.f32 %v280, 0.0
    %v320 = vmax.f32 %v282, 0.0
    %v321 = vmax.f32 %v285, 0.0
    %v322 = vmax.f32 %v287, 0.0
    %v323 = vmax.f32 %v290, 0.0
    %v324 = vmax.f32 %v292, 0.0
    %v325 = vmax.f32 %v295, 0.0
    %v326 = vmax.f32 %v297, 0.0
    %v327 = vmax.f32 %v300, 0.0
    %v328 = vmax.f32 %v302, 0.0
    %v329 = vmax.f32 %v305, 0.0
    %v330 = vmax.f32 %v307, 0.0
    %v331 = vmax.f32 %v310, 0.0
    %v332 = vmax.f32 %v312, 0.0
    %v333 = vmax.f32 %v315, 0.0
    %v334 = vmax.f32 %v317, 0.0
    %v335 = vld [vmem:[%s5] sm:$0xf]
    %v336 = vpack.c.bf16 %v320, %v319
    %v337 = vpack.c.bf16 %v322, %v321
    %v338 = vpack.c.bf16 %v324, %v323
    %v339 = vpack.c.bf16 %v326, %v325
    %v340 = vpack.c.bf16 %v328, %v327
    %v341 = vpack.c.bf16 %v330, %v329
    %v342 = vpack.c.bf16 %v332, %v331
    %v343 = vpack.c.bf16 %v334, %v333
    %v344 = vld [vmem:[%s6] sm:$0xff]
    %346 = vset.pattern.permute.xlu0 0
    %347 = vperm.xlu0 %346, %v344
    %v348 = vpop.permute.xlu0 %347
    %vm350 = vcmask 523264
    %v352 = vsel %vm350, %v335, 0
    %v355 = vsel %vm350, %v336, 0
    %v358 = vsel %vm350, %v337, 0
    %v361 = vsel %vm350, %v338, 0
    %v364 = vsel %vm350, %v339, 0
    %v367 = vsel %vm350, %v340, 0
    %v370 = vsel %vm350, %v341, 0
    %v373 = vsel %vm350, %v342, 0
    %v376 = vsel %vm350, %v343, 0
    %378 = vmatpush.bf16.xpose.msra.mxu0 %v376
    %379 = vmatpush.bf16.xpose.msra.mxu0 %v373
    %380 = vmatpush.bf16.xpose.msra.mxu0 %v370
    %381 = vmatpush.bf16.xpose.msra.mxu0 %v367
    %382 = vmatpush.bf16.xpose.msra.mxu0 %v364
    %383 = vmatpush.bf16.xpose.msra.mxu0 %v361
    %384 = vmatpush.bf16.xpose.msra.mxu0 %v358
    %385 = vmatpush.bf16.xpose.msra.mxu0 %v355
    %386 = vmatmul.bf16.gmra.mxu0 %v352
    %v387 = vpop.f32.mrf.mxu0
    %v388 = vadd.f32 %v348, %v387
    %v389 = vpop.f32.mrf.mxu0
    %390 = vdwg.mxu0
    %v391 = vsub.f32 0.0, %v388
    %v392 = vmul.f32 %v391, 1.442695
    %v393 = vpow.pop %v392
    %v394 = vadd.f32 %v393, 1.0
    %v395 = vrcp.pop %v394
    %396 = vst [vmem:[#allocation2] sm:$0xff] %v395
    // Predicated region
    $region30: #{tpu_custom_call.1} parent=1 // pred_check
      _
    $region31: #{tpu_custom_call.1} parent=1 // pred_check_branch
      %398 = sbr.rel (0) target = $region33
    $region32: #{tpu_custom_call.1} parent=1 // pred_region
      %400 = vsyncadd [#allocation3], 0
      %s402 = sshll.u32 [#allocation2], 4
      %s403 = int_to_ptr.vmem [resolvable:$true] %s402
      %s404 = sshll.u32 %s7, 4
      %s405 = int_to_ptr.hbm [resolvable:$true] %s404
      %407 = dma.vmem_to_hbm [thread:$0]  %s403, 128, %s405, [#allocation3]
    $region33: #{tpu_custom_call.1} parent=1 // pred_fallthru
      _
    // Predicated region
    $region34: #{tpu_custom_call.1} parent=1 // pred_check
      _
    $region35: #{tpu_custom_call.1} parent=1 // pred_check_branch
      %409 = sbr.rel (0) target = $region37
    $region36: #{tpu_custom_call.1} parent=1 // pred_region
      %411 = dma.done [#allocation3], 128
    $region37: #{tpu_custom_call.1} parent=1 // pred_fallthru
      _
    %412 = vsyncpa [#allocation3], 1

</llo_original>
